<compile_context>
chip_gen: v7x
topology: tpu7x:2x2x1
jax: 0.10.0
libtpu: 0.0.40
codegen_flags: <defaults>
</compile_context>

<pallas_src>
import jax
import jax.numpy as jnp
import numpy as np
from jax.experimental import pallas as pl
from jax.experimental.pallas import tpu as pltpu

NEG_FILL = -1e30


def mlp_attn_kernel(x_ref, ww_ref, wv_ref, o_ref):
    # x_ref:  (Rt, H) tile of flattened (seq*batch, hidden) rows
    # ww_ref: (H, H)  proj_w.weight^T  (in, out)
    # wv_ref: (1, H)  proj_v.weight    (row vector)
    x = x_ref[...]

    # proj_w: MXU matmul
    mlp = jnp.dot(x, ww_ref[...], preferred_element_type=jnp.float32)      # (Rt, H)

    # proj_v: (Rt,H) @ (H,1) realized as VPU multiply + lane reduce (XLU),
    # avoiding a 1-lane-wide MXU op and keeping everything lane-dense.
    att = jnp.sum(mlp * wv_ref[...], axis=-1, keepdims=True)               # (Rt, 1)

    # att_scores[att_scores == 0] = -1e30
    att = jnp.where(att == 0.0, NEG_FILL, att)

    # softmax over the last dim (size 1), computed literally as in the module.
    m = jnp.max(att, axis=-1, keepdims=True)
    e = jnp.exp(att - m)
    sm = e / jnp.sum(e, axis=-1, keepdims=True)                            # (Rt, 1)

    # attn_x = normalized scores * x  (broadcast over hidden lanes)
    o_ref[...] = (sm * x).astype(o_ref.dtype)


def mlp_attention(x, ww_t, wv_row, *, row_tile=None):
    """x: (S, B, H); ww_t: (H, H) = proj_w.weight.T; wv_row: (1, H) = proj_v.weight.

    Returns (S, B, H), matching MLPAttentionNetwork.forward in eval mode.
    """
    S, B, H = x.shape
    rows = S * B
    x2 = x.reshape(rows, H)

    if row_tile is None:
        if rows >= 16:
            # largest multiple-of-8 tile that still leaves >= 2 grid steps, capped
            row_tile = max(8, min(256, (rows // 2) // 8 * 8))
        else:
            row_tile = rows

    rows_p = ((rows + row_tile - 1) // row_tile) * row_tile
    if rows_p != rows:
        x2 = jnp.pad(x2, ((0, rows_p - rows), (0, 0)))

    out = pl.pallas_call(
        mlp_attn_kernel,
        out_shape=jax.ShapeDtypeStruct((rows_p, H), x.dtype),
        grid_spec=pltpu.PrefetchScalarGridSpec(
            num_scalar_prefetch=0,
            grid=(rows_p // row_tile,),
            in_specs=[
                pl.BlockSpec((row_tile, H), lambda i: (i, 0)),  # x rows (tiled)
                pl.BlockSpec((H, H), lambda i: (0, 0)),         # proj_w^T (resident)
                pl.BlockSpec((1, H), lambda i: (0, 0)),         # proj_v row (resident)
            ],
            out_specs=pl.BlockSpec((row_tile, H), lambda i: (i, 0)),
        ),
        compiler_params=pltpu.CompilerParams(dimension_semantics=("parallel",)),
    )(x2, ww_t, wv_row)

    return out[:rows].reshape(S, B, H)


def reference(x, ww_t, wv_row):
    """Pure-JAX mirror of the PyTorch forward."""
    mlp = x @ ww_t                                   # (S, B, H)
    att = mlp @ wv_row.T                             # (S, B, 1)
    att = jnp.where(att == 0.0, NEG_FILL, att)
    sm = jax.nn.softmax(att, axis=-1)                # softmax over size-1 dim -> 1.0
    return sm * x


if __name__ == "__main__":
    # Small shapes consistent with the module: seq_len=8, batch=2, hidden_dim=32.
    S, B, H = 8, 2, 32

    key = jax.random.PRNGKey(0)
    kx, kw, kv = jax.random.split(key, 3)

    x = jax.random.normal(kx, (S, B, H), dtype=jnp.float32)
    # Synthetic weights, pre-transposed for x @ W (PyTorch Linear stores (out, in)).
    ww_t = (0.1 * jax.random.normal(kw, (H, H))).astype(jnp.float32)    # proj_w.weight.T
    wv_row = (0.1 * jax.random.normal(kv, (1, H))).astype(jnp.float32)  # proj_v.weight

    out = mlp_attention(x, ww_t, wv_row, row_tile=8)   # 16 rows -> 2 grid steps
    out = jax.block_until_ready(out)

    ref = reference(x, ww_t, wv_row)
    np.testing.assert_allclose(np.asarray(out), np.asarray(ref), rtol=1e-5, atol=1e-5)

    print("KERNEL_OK")
</pallas_src>

<mosaic_0001>
module attributes {stable_mosaic.version = 11 : i64} {
  func.func @mlp_attn_kernel(%arg0: i32, %arg1: memref<8x32xf32, #tpu.memory_space<vmem>>, %arg2: memref<32x32xf32, #tpu.memory_space<vmem>>, %arg3: memref<1x32xf32, #tpu.memory_space<vmem>>, %arg4: memref<8x32xf32, #tpu.memory_space<vmem>>) attributes {dimension_semantics = [#tpu.dimension_semantics<parallel>], iteration_bounds = array<i64: 2>, scalar_prefetch = 0 : i64, scratch_operands = 0 : i64, tpu.core_type = #tpu.core_type<tc>, window_params = [{transform_indices = @transform_0, window_bounds = array<i64: 8, 32>}, {pipeline_mode = #tpu.pipeline_mode<synchronous>, transform_indices = @transform_1, window_bounds = array<i64: 32, 32>}, {pipeline_mode = #tpu.pipeline_mode<synchronous>, transform_indices = @transform_2, window_bounds = array<i64: 1, 32>}, {transform_indices = @transform_3, window_bounds = array<i64: 8, 32>}]} {
    %c0 = arith.constant 0 : index
    %c0_0 = arith.constant 0 : index
    %0 = vector.load %arg1[%c0, %c0_0] : memref<8x32xf32, #tpu.memory_space<vmem>>, vector<8x32xf32>
    %c0_1 = arith.constant 0 : index
    %c0_2 = arith.constant 0 : index
    %1 = vector.load %arg2[%c0_1, %c0_2] : memref<32x32xf32, #tpu.memory_space<vmem>>, vector<32x32xf32>
    %cst = arith.constant dense<0.000000e+00> : vector<8x32xf32>
    %2 = tpu.matmul %0, %1, %cst {dimension_numbers = #tpu.dot_dimension_numbers<[1], [0], [0], [1], [0, 0, 1, 1], [], []>} : vector<8x32xf32>, vector<32x32xf32>, vector<8x32xf32> -> vector<8x32xf32>
    %c0_3 = arith.constant 0 : index
    %c0_4 = arith.constant 0 : index
    %3 = vector.load %arg3[%c0_3, %c0_4] : memref<1x32xf32, #tpu.memory_space<vmem>>, vector<1x32xf32>
    %4 = vector.broadcast %3 : vector<1x32xf32> to vector<8x32xf32>
    %5 = arith.mulf %2, %4 : vector<8x32xf32>
    %cst_5 = arith.constant dense<0.000000e+00> : vector<8xf32>
    %6 = vector.multi_reduction <add>, %5, %cst_5 [1] : vector<8x32xf32> to vector<8xf32>
    %7 = vector.shape_cast %6 : vector<8xf32> to vector<8x1xf32>
    %cst_6 = arith.constant 0.000000e+00 : f32
    %8 = vector.broadcast %cst_6 : f32 to vector<8x1xf32>
    %9 = arith.cmpf oeq, %7, %8 : vector<8x1xf32>
    %cst_7 = arith.constant -1.000000e+30 : f32
    %10 = vector.broadcast %cst_7 : f32 to vector<8x1xf32>
    %11 = arith.select %9, %10, %7 : vector<8x1xi1>, vector<8x1xf32>
    %cst_8 = arith.constant dense<0xFF800000> : vector<8xf32>
    %12 = vector.multi_reduction <maximumf>, %11, %cst_8 [1] : vector<8x1xf32> to vector<8xf32>
    %13 = vector.shape_cast %12 : vector<8xf32> to vector<8x1xf32>
    %14 = arith.subf %11, %13 : vector<8x1xf32>
    %15 = math.exp %14 : vector<8x1xf32>
    %cst_9 = arith.constant dense<0.000000e+00> : vector<8xf32>
    %16 = vector.multi_reduction <add>, %15, %cst_9 [1] : vector<8x1xf32> to vector<8xf32>
    %17 = vector.shape_cast %16 : vector<8xf32> to vector<8x1xf32>
    %18 = arith.divf %15, %17 : vector<8x1xf32>
    %19 = vector.broadcast %18 : vector<8x1xf32> to vector<8x32xf32>
    %20 = arith.mulf %19, %0 : vector<8x32xf32>
    %c0_10 = arith.constant 0 : index
    %c0_11 = arith.constant 0 : index
    %21 = vector.load %arg4[%c0_10, %c0_11] : memref<8x32xf32, #tpu.memory_space<vmem>>, vector<8x32xf32>
    tpu.vector_store %arg4[%c0_10, %c0_11], %20 {strides = array<i32>} : memref<8x32xf32, #tpu.memory_space<vmem>>, vector<8x32xf32>,
    return
  }
  func.func @transform_0(%arg0: i32) -> (i32, i32) {
    %c0_i32 = arith.constant 0 : i32
    %c0_i32_0 = arith.constant 0 : i32
    return %arg0, %c0_i32 : i32, i32
  }
  func.func @transform_1(%arg0: i32) -> (i32, i32) {
    %c0_i32 = arith.constant 0 : i32
    %c0_i32_0 = arith.constant 0 : i32
    %c0_i32_1 = arith.constant 0 : i32
    return %c0_i32, %c0_i32_0 : i32, i32
  }
  func.func @transform_2(%arg0: i32) -> (i32, i32) {
    %c0_i32 = arith.constant 0 : i32
    %c0_i32_0 = arith.constant 0 : i32
    %c0_i32_1 = arith.constant 0 : i32
    return %c0_i32, %c0_i32_0 : i32, i32
  }
  func.func @transform_3(%arg0: i32) -> (i32, i32) {
    %c0_i32 = arith.constant 0 : i32
    %c0_i32_0 = arith.constant 0 : i32
    return %arg0, %c0_i32 : i32, i32
  }
}

</mosaic_0001>

<llo_original>
// kernel: tpu_custom_call.1
$region0: #{tpu_custom_call.1}
  #allocation0 [shape = 'u32[]', space=smem, size = 0x4, offset = 0x4, fixed_abs, tag = 'smem constant byte address 0x4 - core index']
  #allocation1 [shape = 'u32[144,128]{1,0:T(1,128)}', space=vmem, size = 0x12000, scoped, tag = 'internal scratch']
  %s0 = inlined_call_operand.hbm [shape: f32[16,32], index: 0, kind: input, shape index: {}]
  %s1 = inlined_call_operand.hbm [shape: f32[32,32], index: 1, kind: input, shape index: {}]
  %s2 = inlined_call_operand.vmem [shape: f32[1,32], index: 2, kind: input, shape index: {}]
  %s3 = inlined_call_operand.hbm [shape: f32[16,32], index: 3, kind: output, shape index: {}]
  %s4 = sld [smem:[#allocation0]]
  $region53: #{tpu_custom_call.1} parent=0
    _
  %s6 = ssub.s32 1, %s4
  %s7 = scalar_select 0, %s6, %s4
  $region1: #{tpu_custom_call.1} parent=0
    #allocation2 [shape = 'u8[8192]{0}', space=vmem, size = 0x2000, scoped, tag = 'input window, operand 0']
    #allocation3 [shape = 's32[2]{0}', space=sflag, size = 0x8, scoped, tag = 'scoped memory for tpu_custom_call.1']
    #allocation4 [shape = 's32[2]{0}', space=sflag, size = 0x8, scoped, tag = 'scoped memory for tpu_custom_call.1']
    #allocation5 [shape = 'u8[16384]{0}', space=vmem, size = 0x4000, scoped, tag = 'input window, operand 1, single buffered']
    #allocation6 [shape = 's32[1]{0}', space=sflag, size = 0x4, scoped, tag = 'scoped memory for tpu_custom_call.1']
    #allocation7 [shape = 'u8[8192]{0}', space=vmem, size = 0x2000, scoped, tag = 'output window, operand 0']
    %8 = vsyncpa [#allocation3], 0
    %s9 = scalar_lea.sflag [#allocation3], 1
    %10 = vsyncpa %s9, 0
    %11 = vsyncpa [#allocation6], 0
    %12 = vsyncpa [#allocation4], 0
    %s13 = scalar_lea.sflag [#allocation4], 1
    %14 = vsyncpa %s13, 0
    loop: start=0, step=1, limit=4
    $region2: #{tpu_custom_call.1} parent=1 // loop_pre_header
      _
    $region3: #{tpu_custom_call.1} parent=1 // loop_header
      %s16 = sphi 0, %s20
      %p17 = scmp.ge.s32.totalorder %s16, 4
      %s26 = sphi 0, %s28
      %s29 = sphi 0, %s26
      %s30 = sphi 0, %s29
      %s46 = sphi 0, %s30
      %s50 = sphi 0, %s50
      %s52 = sphi 0, %s50
      %s53 = sphi 0, %s52
      %s67 = sphi 0, %s53
      %s71 = sphi 0, %s71
      %s73 = sphi 0, %s71
      %s74 = sphi 0, %s73
      %s88 = sphi 0, %s74
      %s94 = sphi 0, %s96
      %s97 = sphi 0, %s94
      %s98 = sphi 0, %s97
      %s114 = sphi 0, %s98
    $region4: #{tpu_custom_call.1} parent=1 // loop_header_branch
      %19 = sbr.rel (%p17) target = $region8
    $region5: #{tpu_custom_call.1} parent=1 // loop_body
      %s21 = ssub.s32 %s16, 1
      %s22 = ssub.s32 %s16, 2
      %s23 = sadd.s32 %s16, 1
      %s24 = ssub.s32 %s16, %s23
      %p25 = scmp.eq.s32.totalorder %s24, 0
      %s27 = sadd.s32 %s26, 1
      %s28 = scalar_select %p25, %s26, %s27
      %p31 = pneg %p25
      %p32 = scmp.eq.s32.totalorder %s16, 1
      %p33 = por %p31, %p32
      %p34 = scmp.ne.s32.totalorder %s26, %s29
      %p35 = scmp.eq.s32.totalorder %s16, 0
      %p36 = por %p34, %p35
      %p37 = scmp.ne.s32.totalorder %s26, %s29
      %p38 = scmp.eq.s32.totalorder %s21, 1
      %p39 = por %p37, %p38
      %p40 = scmp.ne.s32.totalorder %s29, %s30
      %p41 = scmp.eq.s32.totalorder %s21, 0
      %p42 = por %p40, %p41
      %p43 = scmp.ne.s32.totalorder %s29, %s30
      %p44 = scmp.eq.s32.totalorder %s22, 1
      %p45 = por %p43, %p44
      %p47 = scmp.ne.s32.totalorder %s30, %s46
      %p48 = scmp.eq.s32.totalorder %s22, 0
      %p49 = por %p47, %p48
      %s51 = sadd.s32 %s50, 1
      %p54 = scmp.eq.s32.totalorder %s16, 1
      %p55 = scmp.ne.s32.totalorder %s50, %s52
      %p56 = scmp.eq.s32.totalorder %s16, 0
      %p57 = por %p55, %p56
      %p58 = scmp.ne.s32.totalorder %s50, %s52
      %p59 = scmp.eq.s32.totalorder %s21, 1
      %p60 = por %p58, %p59
      %p61 = scmp.ne.s32.totalorder %s52, %s53
      %p62 = scmp.eq.s32.totalorder %s21, 0
      %p63 = por %p61, %p62
      %p64 = scmp.ne.s32.totalorder %s52, %s53
      %p65 = scmp.eq.s32.totalorder %s22, 1
      %p66 = por %p64, %p65
      %p68 = scmp.ne.s32.totalorder %s53, %s67
      %p69 = scmp.eq.s32.totalorder %s22, 0
      %p70 = por %p68, %p69
      %s72 = sadd.s32 %s71, 1
      %p75 = scmp.eq.s32.totalorder %s16, 1
      %p76 = scmp.ne.s32.totalorder %s71, %s73
      %p77 = scmp.eq.s32.totalorder %s16, 0
      %p78 = por %p76, %p77
      %p79 = scmp.ne.s32.totalorder %s71, %s73
      %p80 = scmp.eq.s32.totalorder %s21, 1
      %p81 = por %p79, %p80
      %p82 = scmp.ne.s32.totalorder %s73, %s74
      %p83 = scmp.eq.s32.totalorder %s21, 0
      %p84 = por %p82, %p83
      %p85 = scmp.ne.s32.totalorder %s73, %s74
      %p86 = scmp.eq.s32.totalorder %s22, 1
      %p87 = por %p85, %p86
      %p89 = scmp.ne.s32.totalorder %s74, %s88
      %p90 = scmp.eq.s32.totalorder %s22, 0
      %p91 = por %p89, %p90
      %s92 = ssub.s32 %s16, %s23
      %p93 = scmp.eq.s32.totalorder %s92, 0
      %s95 = sadd.s32 %s94, 1
      %s96 = scalar_select %p93, %s94, %s95
      %p99 = pneg %p93
      %p100 = scmp.eq.s32.totalorder %s16, 1
      %p101 = por %p99, %p100
      %p102 = scmp.ne.s32.totalorder %s94, %s97
      %p103 = scmp.eq.s32.totalorder %s16, 0
      %p104 = por %p102, %p103
      %p105 = scmp.ne.s32.totalorder %s94, %s97
      %p106 = scmp.eq.s32.totalorder %s21, 1
      %p107 = por %p105, %p106
      %p108 = scmp.ne.s32.totalorder %s97, %s98
      %p109 = scmp.eq.s32.totalorder %s21, 0
      %p110 = por %p108, %p109
      %p111 = scmp.ne.s32.totalorder %s97, %s98
      %p112 = scmp.eq.s32.totalorder %s22, 1
      %p113 = por %p111, %p112
      %p115 = scmp.ne.s32.totalorder %s98, %s114
      %p116 = scmp.eq.s32.totalorder %s22, 0
      %p117 = por %p115, %p116
      %p118 = scmp.le.s32.totalorder 1, %s16
      %p119 = scmp.lt.s32.totalorder %s16, 3
      %p120 = pnand %p118, %p119
      %p121 = pneg %p120
      // Predicated region
      $region9: #{tpu_custom_call.1} parent=5 // pred_check
        _
      $region10: #{tpu_custom_call.1} parent=5 // pred_check_branch
        %123 = sbr.rel (%p120) target = $region12
      $region11: #{tpu_custom_call.1} parent=5 // pred_region
        %s124 = ssub.s32 %s16, 1
        // Predicated region
        $region13: #{tpu_custom_call.1} parent=11 // pred_check
          %p125 = pneg %p63
        $region14: #{tpu_custom_call.1} parent=11 // pred_check_branch
          %127 = sbr.rel (%p125) target = $region16
        $region15: #{tpu_custom_call.1} parent=11 // pred_region
          %s129 = ssub.s32 512, 512
          %130 = vsyncadd [#allocation6], %s129
          %s131 = sshll.u32 [#allocation5], 4
          %s132 = int_to_ptr.vmem [resolvable:$true] %s131
          %137 = dma.hbm_to_vmem [thread:$0]  %s1, 512, %s132, [#allocation6], 128, 128, 8
        $region16: #{tpu_custom_call.1} parent=11 // pred_fallthru
          _
        // Predicated region
        $region17: #{tpu_custom_call.1} parent=11 // pred_check
          %p138 = pneg %p84
        $region18: #{tpu_custom_call.1} parent=11 // pred_check_branch
          %140 = sbr.rel (%p138) target = $region20
        $region19: #{tpu_custom_call.1} parent=11 // pred_region
          _
        $region20: #{tpu_custom_call.1} parent=11 // pred_fallthru
          _
      $region12: #{tpu_custom_call.1} parent=5 // pred_fallthru
        _
      %p141 = scmp.lt.s32.totalorder %s16, 2
      // Predicated region
      $region21: #{tpu_custom_call.1} parent=5 // pred_check
        %p142 = pneg %p141
      $region22: #{tpu_custom_call.1} parent=5 // pred_check_branch
        %144 = sbr.rel (%p142) target = $region24
      $region23: #{tpu_custom_call.1} parent=5 // pred_region
        // Predicated region
        $region25: #{tpu_custom_call.1} parent=23 // pred_check
          %p145 = pneg %p36
        $region26: #{tpu_custom_call.1} parent=23 // pred_check_branch
          %147 = sbr.rel (%p145) target = $region28
        $region27: #{tpu_custom_call.1} parent=23 // pred_region
          %s148 = sand.u32 %s26, 1
          %s149 = scalar_lea.sflag [#allocation3], %s148
          %s150 = sand.u32 %s26, 1
          %s151 = smul.addr %s150, 8
          %s152 = scalar_lea.vmem [#allocation2], %s151
          %s154 = ssub.s32 128, 128
          %155 = vsyncadd %s149, %s154
          %s156 = smul.addr %s16, 128
          %s157 = scalar_lea.hbm %s0, %s156
          %s159 = sshll.u32 %s152, 4
          %s160 = int_to_ptr.vmem [resolvable:$true] %s159
          %162 = dma.hbm_to_vmem [thread:$0]  %s157, 128, %s160, %s149
        $region28: #{tpu_custom_call.1} parent=23 // pred_fallthru
          _
      $region24: #{tpu_custom_call.1} parent=5 // pred_fallthru
        _
      %p163 = scmp.le.s32.totalorder 1, %s16
      %p164 = scmp.lt.s32.totalorder %s16, 3
      %p165 = pnand %p163, %p164
      %p166 = pneg %p165
      // Predicated region
      $region29: #{tpu_custom_call.1} parent=5 // pred_check
        _
      $region30: #{tpu_custom_call.1} parent=5 // pred_check_branch
        %168 = sbr.rel (%p165) target = $region32
      $region31: #{tpu_custom_call.1} parent=5 // pred_region
        %s169 = ssub.s32 %s16, 1
        %s170 = sand.u32 %s29, 1
        %s171 = scalar_lea.sflag [#allocation3], %s170
        %s172 = sand.u32 %s29, 1
        %s173 = smul.addr %s172, 8
        %s174 = scalar_lea.vmem [#allocation2], %s173
        // Predicated region
        $region33: #{tpu_custom_call.1} parent=31 // pred_check
          %p175 = pneg %p42
        $region34: #{tpu_custom_call.1} parent=31 // pred_check_branch
          %177 = sbr.rel (%p175) target = $region36
        $region35: #{tpu_custom_call.1} parent=31 // pred_region
          %178 = dma.done %s171, 128
        $region36: #{tpu_custom_call.1} parent=31 // pred_fallthru
          _
        // Predicated region
        $region37: #{tpu_custom_call.1} parent=31 // pred_check
          %p179 = pneg %p63
        $region38: #{tpu_custom_call.1} parent=31 // pred_check_branch
          %181 = sbr.rel (%p179) target = $region40
        $region39: #{tpu_custom_call.1} parent=31 // pred_region
          %182 = dma.done [#allocation6], 512
        $region40: #{tpu_custom_call.1} parent=31 // pred_fallthru
          _
        %s183 = sand.u32 %s29, 1
        %s184 = scalar_lea.sflag [#allocation3], %s183
        %s185 = sand.u32 %s29, 1
        %s186 = smul.addr %s185, 8
        %s187 = scalar_lea.vmem [#allocation2], %s186
        %p188 = pneg %p42
        %p189 = pneg %p39
        %p190 = pneg %p63
        %p191 = pneg %p60
        %p192 = pneg %p84
        %p193 = pneg %p81
        %p194 = pneg %p110
        %p195 = pneg %p107
        %s196 = sand.u32 %s97, 1
        %s197 = scalar_lea.sflag [#allocation4], %s196
        %s198 = sand.u32 %s97, 1
        %s199 = smul.addr %s198, 8
        %s200 = scalar_lea.vmem [#allocation7], %s199
        %v201 = vld [vmem:[%s174] sm:$0xff]
        %v202 = vld [vmem:[#allocation5] sm:$0xff]
        %v203 = vld [vmem:[#allocation5 + $0x8] sm:$0xff]
        %v204 = vld [vmem:[#allocation5 + $0x10] sm:$0xff]
        %v205 = vld [vmem:[#allocation5 + $0x18] sm:$0xff]
        %vm206 = vcmask 261120
        %v208 = vsel %vm206, %v201, 0
        %210 = vmatprep.subr.mxu0 0.0
        %211 = vmatpush1.msra.mxu0 %v202
        %212 = vmatprep.subr.mxu0 0.0
        %213 = vmatpush1.msra.mxu0 %v203
        %214 = vmatprep.subr.mxu0 0.0
        %215 = vmatpush1.msra.mxu0 %v204
        %216 = vmatprep.subr.mxu0 0.0
        %217 = vmatpush1.msra.mxu0 %v205
        %218 = vmatprep.subr.mxu0 0.0
        %219 = vmatpush1.msra.mxu0 0.0
        %220 = vmatprep.subr.mxu0 0.0
        %221 = vmatpush1.msra.mxu0 0.0
        %222 = vmatprep.subr.mxu0 0.0
        %223 = vmatpush1.msra.mxu0 0.0
        %224 = vmatprep.subr.mxu0 0.0
        %225 = vmatpush1.msra.mxu0 0.0
        %226 = vmatprep.subr.mxu0 0.0
        %227 = vmatpush1.msra.mxu0 0.0
        %228 = vmatprep.subr.mxu0 0.0
        %229 = vmatpush1.msra.mxu0 0.0
        %230 = vmatprep.subr.mxu0 0.0
        %231 = vmatpush1.msra.mxu0 0.0
        %232 = vmatprep.subr.mxu0 0.0
        %233 = vmatpush1.msra.mxu0 0.0
        %234 = vmatprep.subr.mxu0 0.0
        %235 = vmatpush1.msra.mxu0 0.0
        %236 = vmatprep.subr.mxu0 0.0
        %237 = vmatpush1.msra.mxu0 0.0
        %238 = vmatprep.subr.mxu0 0.0
        %239 = vmatpush1.msra.mxu0 0.0
        %240 = vmatprep.subr.mxu0 0.0
        %241 = vmatpush1.msra.mxu0 0.0
        %242 = vmatprep.subr.mxu0 0.0
        %243 = vmatpush1.msra.mxu0 0.0
        %244 = vmatprep.subr.mxu0 0.0
        %245 = vmatpush1.msra.mxu0 0.0
        %246 = vmatprep.subr.mxu0 0.0
        %247 = vmatpush1.msra.mxu0 0.0
        %248 = vmatprep.subr.mxu0 0.0
        %249 = vmatpush1.msra.mxu0 0.0
        %250 = vmatprep.subr.mxu0 0.0
        %251 = vmatpush1.msra.mxu0 0.0
        %252 = vmatprep.subr.mxu0 0.0
        %253 = vmatpush1.msra.mxu0 0.0
        %254 = vmatprep.subr.mxu0 0.0
        %255 = vmatpush1.msra.mxu0 0.0
        %256 = vmatprep.subr.mxu0 0.0
        %257 = vmatpush1.msra.mxu0 0.0
        %258 = vmatprep.subr.mxu0 0.0
        %259 = vmatpush1.msra.mxu0 0.0
        %260 = vmatprep.subr.mxu0 0.0
        %261 = vmatpush1.msra.mxu0 0.0
        %262 = vmatprep.subr.mxu0 0.0
        %263 = vmatpush1.msra.mxu0 0.0
        %264 = vmatprep.subr.mxu0 0.0
        %265 = vmatpush1.msra.mxu0 0.0
        %266 = vmatprep.subr.mxu0 0.0
        %267 = vmatpush1.msra.mxu0 0.0
        %268 = vmatprep.subr.mxu0 0.0
        %269 = vmatpush1.msra.mxu0 0.0
        %270 = vmatprep.subr.mxu0 0.0
        %271 = vmatpush1.msra.mxu0 0.0
        %272 = vmatprep.subr.mxu0 0.0
        %273 = vmatpush1.msra.mxu0 0.0
        %274 = vmatprep.mubr.f32.mxu0 0.0
        %275 = vmatmul.mubr.f32.gmra.mrb[0].mxu0 %v208
        %v276 = vpop.f32.mrb[0].mxu0
        %v277 = vadd.f32 0.0, %v276
        %v278 = vpop.f32.mrb[0].mxu0
        %279 = vdwg.mxu0
        %v280 = vld [vmem:[%s2] sm:$0x1]
        %v282 = vlaneseq
        %v283 = vshrl.u32 %v282, 7
        %v284 = vsub.s32 0, %v283
        %v285 = vrot.slane %v280, %v284
        %v287 = vmul.f32 %v277, %v285
        %v288 = vsel %vm206, %v287, 0.0
        %289 = vadd.xlane.f32.xlu0 %v288
        %v290 = vpop.xlane.xlu0 %289
        %vm291 = vcmp.eq.f32.partialorder %v290, 0.0
        %v292 = vsel %vm291, -1e+30, %v290
        %v293 = vsub.f32 %v292, %v292
        %v294 = vmul.f32 %v293, 1.442695
        %v295 = vpow.pop %v294
        %v296 = vadd.f32 %v295, 0.0
        %v297 = vrcp.pop %v296
        %v298 = vmul.f32 %v295, %v297
        %v299 = vmul.f32 %v298, %v201
        %300 = vst.msk [vmem:[%s200] sm:$0xff] %vm206, %v299
        %s301 = sand.u32 %s97, 1
        %s302 = scalar_lea.sflag [#allocation4], %s301
        %s303 = sand.u32 %s97, 1
        %s304 = smul.addr %s303, 8
        %s305 = scalar_lea.vmem [#allocation7], %s304
        // Predicated region
        $region41: #{tpu_custom_call.1} parent=31 // pred_check
          %p306 = pneg %p107
        $region42: #{tpu_custom_call.1} parent=31 // pred_check_branch
          %308 = sbr.rel (%p306) target = $region44
        $region43: #{tpu_custom_call.1} parent=31 // pred_region
          %s310 = ssub.s32 128, 128
          %311 = vsyncadd %s302, %s310
          %s312 = smul.addr %s21, 128
          %s313 = scalar_lea.hbm %s3, %s312
          %s315 = sshll.u32 %s305, 4
          %s316 = int_to_ptr.vmem [resolvable:$true] %s315
          %318 = dma.vmem_to_hbm [thread:$0]  %s316, 128, %s313, %s302
        $region44: #{tpu_custom_call.1} parent=31 // pred_fallthru
          _
      $region32: #{tpu_custom_call.1} parent=5 // pred_fallthru
        _
      %p319 = scmp.le.s32.totalorder 2, %s16
      // Predicated region
      $region45: #{tpu_custom_call.1} parent=5 // pred_check
        %p320 = pneg %p319
      $region46: #{tpu_custom_call.1} parent=5 // pred_check_branch
        %322 = sbr.rel (%p320) target = $region48
      $region47: #{tpu_custom_call.1} parent=5 // pred_region
        %s323 = ssub.s32 %s16, 2
        // Predicated region
        $region49: #{tpu_custom_call.1} parent=47 // pred_check
          %p324 = pneg %p113
        $region50: #{tpu_custom_call.1} parent=47 // pred_check_branch
          %326 = sbr.rel (%p324) target = $region52
        $region51: #{tpu_custom_call.1} parent=47 // pred_region
          %s327 = sand.u32 %s98, 1
          %s328 = scalar_lea.sflag [#allocation4], %s327
          %s329 = sand.u32 %s98, 1
          %s330 = smul.addr %s329, 8
          %s331 = scalar_lea.vmem [#allocation7], %s330
          %332 = dma.done %s328, 128
        $region52: #{tpu_custom_call.1} parent=47 // pred_fallthru
          _
      $region48: #{tpu_custom_call.1} parent=5 // pred_fallthru
        _
    $region6: #{tpu_custom_call.1} parent=1 // loop_footer
      %s20 = sadd.s32 1, %s16
    $region7: #{tpu_custom_call.1} parent=1 // loop_footer_branch
      %15 = sbr.rel target = $region3
    $region8: #{tpu_custom_call.1} parent=1 // loop_exit
      _
    %333 = vsyncpa [#allocation3], 1
    %s334 = scalar_lea.sflag [#allocation3], 1
    %335 = vsyncpa %s334, 1
    %336 = vsyncpa [#allocation6], 1
    %337 = vsyncpa [#allocation4], 1
    %s338 = scalar_lea.sflag [#allocation4], 1
    %339 = vsyncpa %s338, 1

</llo_original>
